<compile_context>
chip_gen: v7x
topology: tpu7x:2x2x1
jax: 0.10.0
libtpu: 0.0.40
codegen_flags: <defaults>
</compile_context>

<pallas_src>
import functools

import jax
import jax.numpy as jnp
from jax import lax
from jax.experimental import pallas as pl
from jax.experimental.pallas import tpu as pltpu

LANES = 128
SUBLANES = 8


def _round_up(x, m):
    return ((x + m - 1) // m) * m


def actor_critic_kernel(x_ref, w1_ref, b1_ref, wac_ref, bac_ref, out_ref, *,
                        action_num):
    # fc1 + ReLU. Hidden dim is pre-padded to a multiple of 128 lanes, so h is a
    # full-vreg (TB, Hp) tile and the bias add is an unmasked VPU op.
    # TODO(synk): for production feature/hidden widths cast x / weights to bf16 here
    # (keep f32 accumulation) to hit MXU peak; kept f32 at toy sizes for exactness.
    x = x_ref[...]
    h = jnp.dot(x, w1_ref[...], preferred_element_type=jnp.float32) + b1_ref[...]
    h = jnp.maximum(h, 0.0)

    # Fused actor+critic head: ONE MXU push producing a 128-lane result.
    # Lanes [0, A) = actor logits, lane A = critic value, lanes > A = 0 (zero weights).
    y = jnp.dot(h, wac_ref[...], preferred_element_type=jnp.float32) + bac_ref[...]

    lane = lax.broadcasted_iota(jnp.int32, y.shape, 1)
    is_action = lane < action_num

    # Numerically-stable softmax restricted to the action lanes (others -> -inf -> exp 0).
    logits = jnp.where(is_action, y, -jnp.inf)
    m = jnp.max(logits, axis=-1, keepdims=True)
    e = jnp.exp(logits - m)                                   # 0 in non-action lanes
    denom = jnp.sum(e, axis=-1, keepdims=True)
    probs = e * pl.reciprocal(denom, approx=True)             # EUP vrcp, ~2^-12 rel err

    # Lane-dense (TB, 128) output slab: probs in lanes 0..A-1, value in lane A, 0 elsewhere.
    out_ref[...] = jnp.where(lane == action_num, y, probs).astype(out_ref.dtype)


def actor_critic_forward(x, packed_params, action_num, *, batch_tile=512):
    """x: [B, feature_num] float32.

    Returns (action_prob [B, A], state_values [B, 1]).
    """
    w1p, b1p, wacp, bacp = packed_params
    B, F = x.shape
    Hp = w1p.shape[1]
    assert wacp.shape == (Hp, LANES) and bacp.shape == (1, LANES)

    # Large batch tile (multiple of 8 sublanes); pad the batch so the grid divides evenly.
    TB = _round_up(min(batch_tile, _round_up(B, SUBLANES)), SUBLANES)
    B_pad = _round_up(B, TB)
    if B_pad != B:
        x = jnp.pad(x, ((0, B_pad - B), (0, 0)))

    grid = (B_pad // TB,)

    cost = pl.CostEstimate(
        flops=2 * B_pad * (F * Hp + Hp * LANES),
        transcendentals=B_pad * LANES,
        bytes_accessed=4 * (B_pad * F + F * Hp + Hp + Hp * LANES + LANES
                            + B_pad * LANES),
    )

    out = pl.pallas_call(
        functools.partial(actor_critic_kernel, action_num=action_num),
        out_shape=jax.ShapeDtypeStruct((B_pad, LANES), jnp.float32),
        grid=grid,
        in_specs=[
            pl.BlockSpec((TB, F), lambda i: (i, 0)),        # x: blocked on batch
            pl.BlockSpec((F, Hp), lambda i: (0, 0)),        # weights stay VMEM-resident
            pl.BlockSpec((1, Hp), lambda i: (0, 0)),
            pl.BlockSpec((Hp, LANES), lambda i: (0, 0)),
            pl.BlockSpec((1, LANES), lambda i: (0, 0)),
        ],
        out_specs=pl.BlockSpec((TB, LANES), lambda i: (i, 0)),
        compiler_params=pltpu.CompilerParams(
            dimension_semantics=("parallel",),              # megacore-shardable on v7x
            vmem_limit_bytes=64 << 20,
        ),
        cost_estimate=cost,
    )(x, w1p, b1p, wacp, bacp)

    action_prob = out[:B, :action_num]
    state_values = out[:B, action_num:action_num + 1]
    return action_prob, state_values


def init_params(key, feature_num, hidden_num, action_num):
    """Deterministic init matching nn.Linear's uniform(-1/sqrt(fan_in), 1/sqrt(fan_in)).
    Weights stored transposed as (in, out); biases as (1, out)."""
    k1, k2, k3, k4, k5, k6 = jax.random.split(key, 6)

    def lin(kw, kb, fan_in, fan_out):
        bound = 1.0 / jnp.sqrt(jnp.float32(fan_in))
        w = jax.random.uniform(kw, (fan_in, fan_out), jnp.float32, -bound, bound)
        b = jax.random.uniform(kb, (1, fan_out), jnp.float32, -bound, bound)
        return w, b

    w1, b1 = lin(k1, k2, feature_num, hidden_num)
    wa, ba = lin(k3, k4, hidden_num, action_num)
    wc, bc = lin(k5, k6, hidden_num, 1)
    return (w1, b1, wa, ba, wc, bc)


def pack_params(params):
    """One-time packing: fuse actor+critic heads into a single (Hp, 128) weight and
    pad the hidden dim / biases to 128 lanes (zero padding, exact semantics)."""
    w1, b1, wa, ba, wc, bc = params
    F, H = w1.shape
    A = wa.shape[1]
    assert A + 1 <= LANES, "action_num + 1 must fit in one 128-lane output slab"
    Hp = _round_up(H, LANES)

    w1p = jnp.zeros((F, Hp), jnp.float32).at[:, :H].set(w1)
    b1p = jnp.zeros((1, Hp), jnp.float32).at[:, :H].set(b1)

    wac = jnp.concatenate([wa, wc], axis=1)                  # (H, A+1)
    bac = jnp.concatenate([ba, bc], axis=1)                  # (1, A+1)
    wacp = jnp.zeros((Hp, LANES), jnp.float32).at[:H, :A + 1].set(wac)
    bacp = jnp.zeros((1, LANES), jnp.float32).at[:, :A + 1].set(bac)
    return (w1p, b1p, wacp, bacp)


if __name__ == "__main__":
    feature_num, hidden_num, action_num = 16, 32, 8
    batch = 8

    key = jax.random.PRNGKey(0)
    kx, kp = jax.random.split(key)
    x = jax.random.normal(kx, (batch, feature_num), jnp.float32)
    params = init_params(kp, feature_num, hidden_num, action_num)
    packed = pack_params(params)

    action_prob, state_values = actor_critic_forward(x, packed, action_num)
    jax.block_until_ready((action_prob, state_values))

    # Reference check in plain JAX (unfused, unpadded weights).
    w1, b1, wa, ba, wc, bc = params
    h_ref = jnp.maximum(x @ w1 + b1, 0.0)
    probs_ref = jax.nn.softmax(h_ref @ wa + ba, axis=-1)
    vals_ref = h_ref @ wc + bc

    assert action_prob.shape == (batch, action_num)
    assert state_values.shape == (batch, 1)
    # approx reciprocal (EUP vrcp) gives ~2^-12 relative error on the probabilities.
    assert jnp.allclose(action_prob, probs_ref, atol=2e-3)
    assert jnp.allclose(state_values, vals_ref, atol=1e-4)

    # TODO(synk): step()/select_action() (returns, Categorical sampling, optimizer) are
    # host-side RL bookkeeping outside the forward pass and are not kernelized.

    print("KERNEL_OK")
</pallas_src>

<mosaic_0001>
module attributes {stable_mosaic.version = 11 : i64} {
  func.func @actor_critic_kernel(%arg0: i32, %arg1: memref<8x16xf32, #tpu.memory_space<vmem>>, %arg2: memref<16x128xf32, #tpu.memory_space<vmem>>, %arg3: memref<1x128xf32, #tpu.memory_space<vmem>>, %arg4: memref<128x128xf32, #tpu.memory_space<vmem>>, %arg5: memref<1x128xf32, #tpu.memory_space<vmem>>, %arg6: memref<8x128xf32, #tpu.memory_space<vmem>>) attributes {dimension_semantics = [#tpu.dimension_semantics<parallel>], iteration_bounds = array<i64: 1>, scalar_prefetch = 0 : i64, scratch_operands = 0 : i64, tpu.core_type = #tpu.core_type<tc>, window_params = [{transform_indices = @transform_0, window_bounds = array<i64: 8, 16>}, {pipeline_mode = #tpu.pipeline_mode<synchronous>, transform_indices = @transform_1, window_bounds = array<i64: 16, 128>}, {pipeline_mode = #tpu.pipeline_mode<synchronous>, transform_indices = @transform_2, window_bounds = array<i64: 1, 128>}, {pipeline_mode = #tpu.pipeline_mode<synchronous>, transform_indices = @transform_3, window_bounds = array<i64: 128, 128>}, {pipeline_mode = #tpu.pipeline_mode<synchronous>, transform_indices = @transform_4, window_bounds = array<i64: 1, 128>}, {transform_indices = @transform_5, window_bounds = array<i64: 8, 128>}]} {
    %c0 = arith.constant 0 : index
    %c0_0 = arith.constant 0 : index
    %0 = vector.load %arg1[%c0, %c0_0] : memref<8x16xf32, #tpu.memory_space<vmem>>, vector<8x16xf32>
    %c0_1 = arith.constant 0 : index
    %c0_2 = arith.constant 0 : index
    %1 = vector.load %arg2[%c0_1, %c0_2] : memref<16x128xf32, #tpu.memory_space<vmem>>, vector<16x128xf32>
    %cst = arith.constant dense<0.000000e+00> : vector<8x128xf32>
    %2 = tpu.matmul %0, %1, %cst {dimension_numbers = #tpu.dot_dimension_numbers<[1], [0], [0], [1], [0, 0, 1, 1], [], []>} : vector<8x16xf32>, vector<16x128xf32>, vector<8x128xf32> -> vector<8x128xf32>
    %c0_3 = arith.constant 0 : index
    %c0_4 = arith.constant 0 : index
    %3 = vector.load %arg3[%c0_3, %c0_4] : memref<1x128xf32, #tpu.memory_space<vmem>>, vector<1x128xf32>
    %4 = vector.broadcast %3 : vector<1x128xf32> to vector<8x128xf32>
    %5 = arith.addf %2, %4 : vector<8x128xf32>
    %cst_5 = arith.constant 0.000000e+00 : f32
    %6 = vector.broadcast %cst_5 : f32 to vector<8x128xf32>
    %7 = arith.maximumf %5, %6 : vector<8x128xf32>
    %c0_6 = arith.constant 0 : index
    %c0_7 = arith.constant 0 : index
    %8 = vector.load %arg4[%c0_6, %c0_7] : memref<128x128xf32, #tpu.memory_space<vmem>>, vector<128x128xf32>
    %cst_8 = arith.constant dense<0.000000e+00> : vector<8x128xf32>
    %9 = tpu.matmul %7, %8, %cst_8 {dimension_numbers = #tpu.dot_dimension_numbers<[1], [0], [0], [1], [0, 0, 1, 1], [], []>} : vector<8x128xf32>, vector<128x128xf32>, vector<8x128xf32> -> vector<8x128xf32>
    %c0_9 = arith.constant 0 : index
    %c0_10 = arith.constant 0 : index
    %10 = vector.load %arg5[%c0_9, %c0_10] : memref<1x128xf32, #tpu.memory_space<vmem>>, vector<1x128xf32>
    %11 = vector.broadcast %10 : vector<1x128xf32> to vector<8x128xf32>
    %12 = arith.addf %9, %11 : vector<8x128xf32>
    %13 = tpu.iota {dimensions = array<i32: 1>} : vector<8x128xi32>
    %c8_i32 = arith.constant 8 : i32
    %14 = vector.broadcast %c8_i32 : i32 to vector<8x128xi32>
    %15 = arith.cmpi slt, %13, %14 : vector<8x128xi32>
    %cst_11 = arith.constant 0xFF800000 : f32
    %16 = vector.broadcast %cst_11 : f32 to vector<8x128xf32>
    %17 = arith.select %15, %12, %16 : vector<8x128xi1>, vector<8x128xf32>
    %cst_12 = arith.constant dense<0xFF800000> : vector<8xf32>
    %18 = vector.multi_reduction <maximumf>, %17, %cst_12 [1] : vector<8x128xf32> to vector<8xf32>
    %19 = vector.shape_cast %18 : vector<8xf32> to vector<8x1xf32>
    %20 = vector.broadcast %19 : vector<8x1xf32> to vector<8x128xf32>
    %21 = arith.subf %17, %20 : vector<8x128xf32>
    %22 = math.exp %21 : vector<8x128xf32>
    %cst_13 = arith.constant dense<0.000000e+00> : vector<8xf32>
    %23 = vector.multi_reduction <add>, %22, %cst_13 [1] : vector<8x128xf32> to vector<8xf32>
    %24 = vector.shape_cast %23 : vector<8xf32> to vector<8x1xf32>
    %25 = tpu.reciprocal %24 {approx = true} : vector<8x1xf32> -> vector<8x1xf32>
    %26 = vector.broadcast %25 : vector<8x1xf32> to vector<8x128xf32>
    %27 = arith.mulf %22, %26 : vector<8x128xf32>
    %c8_i32_14 = arith.constant 8 : i32
    %28 = vector.broadcast %c8_i32_14 : i32 to vector<8x128xi32>
    %29 = arith.cmpi eq, %13, %28 : vector<8x128xi32>
    %30 = arith.select %29, %12, %27 : vector<8x128xi1>, vector<8x128xf32>
    %c0_15 = arith.constant 0 : index
    %c0_16 = arith.constant 0 : index
    %31 = vector.load %arg6[%c0_15, %c0_16] : memref<8x128xf32, #tpu.memory_space<vmem>>, vector<8x128xf32>
    tpu.vector_store %arg6[%c0_15, %c0_16], %30 {strides = array<i32>} : memref<8x128xf32, #tpu.memory_space<vmem>>, vector<8x128xf32>,
    return
  }
  func.func @transform_0(%arg0: i32) -> (i32, i32) {
    %c0_i32 = arith.constant 0 : i32
    %c0_i32_0 = arith.constant 0 : i32
    return %arg0, %c0_i32 : i32, i32
  }
  func.func @transform_1(%arg0: i32) -> (i32, i32) {
    %c0_i32 = arith.constant 0 : i32
    %c0_i32_0 = arith.constant 0 : i32
    %c0_i32_1 = arith.constant 0 : i32
    return %c0_i32, %c0_i32_0 : i32, i32
  }
  func.func @transform_2(%arg0: i32) -> (i32, i32) {
    %c0_i32 = arith.constant 0 : i32
    %c0_i32_0 = arith.constant 0 : i32
    %c0_i32_1 = arith.constant 0 : i32
    return %c0_i32, %c0_i32_0 : i32, i32
  }
  func.func @transform_3(%arg0: i32) -> (i32, i32) {
    %c0_i32 = arith.constant 0 : i32
    %c0_i32_0 = arith.constant 0 : i32
    %c0_i32_1 = arith.constant 0 : i32
    return %c0_i32, %c0_i32_0 : i32, i32
  }
  func.func @transform_4(%arg0: i32) -> (i32, i32) {
    %c0_i32 = arith.constant 0 : i32
    %c0_i32_0 = arith.constant 0 : i32
    %c0_i32_1 = arith.constant 0 : i32
    return %c0_i32, %c0_i32_0 : i32, i32
  }
  func.func @transform_5(%arg0: i32) -> (i32, i32) {
    %c0_i32 = arith.constant 0 : i32
    %c0_i32_0 = arith.constant 0 : i32
    return %arg0, %c0_i32 : i32, i32
  }
}

</mosaic_0001>

<llo_original>
// kernel: tpu_custom_call.1
$region0: #{tpu_custom_call.1}
  #allocation0 [shape = 'u32[]', space=smem, size = 0x4, offset = 0x4, fixed_abs, tag = 'smem constant byte address 0x4 - core index']
  #allocation1 [shape = 'u32[144,128]{1,0:T(1,128)}', space=vmem, size = 0x12000, scoped, tag = 'internal scratch']
  %s0 = inlined_call_operand.hbm [shape: f32[8,16], index: 0, kind: input, shape index: {}]
  %s1 = inlined_call_operand.hbm [shape: f32[16,128], index: 1, kind: input, shape index: {}]
  %s2 = inlined_call_operand.hbm [shape: f32[1,128], index: 2, kind: input, shape index: {}]
  %s3 = inlined_call_operand.hbm [shape: f32[128,128], index: 3, kind: input, shape index: {}]
  %s4 = inlined_call_operand.hbm [shape: f32[1,128], index: 4, kind: input, shape index: {}]
  %s5 = inlined_call_operand.hbm [shape: f32[8,128], index: 5, kind: output, shape index: {}]
  %s6 = sld [smem:[#allocation0]]
  $region50: #{tpu_custom_call.1} parent=0
    _
  %s8 = ssub.s32 1, %s6
  %s9 = scalar_select 0, %s8, %s6
  $region1: #{tpu_custom_call.1} parent=0
    #allocation2 [shape = 'u8[4096]{0}', space=vmem, size = 0x1000, scoped, tag = 'input window, operand 0, single buffered']
    #allocation3 [shape = 's32[1]{0}', space=sflag, size = 0x4, scoped, tag = 'scoped memory for tpu_custom_call.1']
    #allocation4 [shape = 's32[1]{0}', space=sflag, size = 0x4, scoped, tag = 'scoped memory for tpu_custom_call.1']
    #allocation5 [shape = 'u8[8192]{0}', space=vmem, size = 0x2000, scoped, tag = 'input window, operand 1, single buffered']
    #allocation6 [shape = 's32[1]{0}', space=sflag, size = 0x4, scoped, tag = 'scoped memory for tpu_custom_call.1']
    #allocation7 [shape = 'u8[512]{0}', space=vmem, size = 0x400, scoped, tag = 'input window, operand 2, single buffered']
    #allocation8 [shape = 'u8[65536]{0}', space=vmem, size = 0x10000, scoped, tag = 'input window, operand 3, single buffered']
    #allocation9 [shape = 's32[1]{0}', space=sflag, size = 0x4, scoped, tag = 'scoped memory for tpu_custom_call.1']
    #allocation10 [shape = 'u8[512]{0}', space=vmem, size = 0x400, scoped, tag = 'input window, operand 4, single buffered']
    #allocation11 [shape = 'u8[4096]{0}', space=vmem, size = 0x1000, scoped, tag = 'output window, operand 0, single buffered']
    %10 = vsyncpa [#allocation3], 0
    %11 = vsyncpa [#allocation6], 0
    %12 = vsyncpa [#allocation9], 0
    %13 = vsyncpa [#allocation4], 0
    // Predicated region
    $region2: #{tpu_custom_call.1} parent=1 // pred_check
      _
    $region3: #{tpu_custom_call.1} parent=1 // pred_check_branch
      %15 = sbr.rel (0) target = $region5
    $region4: #{tpu_custom_call.1} parent=1 // pred_region
      %s17 = ssub.s32 128, 128
      %18 = vsyncadd [#allocation3], %s17
      %s20 = sshll.u32 [#allocation2], 4
      %s21 = int_to_ptr.vmem [resolvable:$true] %s20
      %23 = dma.hbm_to_vmem [thread:$0]  %s0, 128, %s21, [#allocation3]
    $region5: #{tpu_custom_call.1} parent=1 // pred_fallthru
      _
    // Predicated region
    $region6: #{tpu_custom_call.1} parent=1 // pred_check
      _
    $region7: #{tpu_custom_call.1} parent=1 // pred_check_branch
      %25 = sbr.rel (0) target = $region9
    $region8: #{tpu_custom_call.1} parent=1 // pred_region
      %s27 = ssub.s32 256, 256
      %28 = vsyncadd [#allocation6], %s27
      %s29 = sshll.u32 [#allocation5], 4
      %s30 = int_to_ptr.vmem [resolvable:$true] %s29
      %35 = dma.hbm_to_vmem [thread:$0]  %s1, 256, %s30, [#allocation6], 128, 128, 8
    $region9: #{tpu_custom_call.1} parent=1 // pred_fallthru
      _
    // Predicated region
    $region10: #{tpu_custom_call.1} parent=1 // pred_check
      _
    $region11: #{tpu_custom_call.1} parent=1 // pred_check_branch
      %37 = sbr.rel (0) target = $region13
    $region12: #{tpu_custom_call.1} parent=1 // pred_region
      %s39 = ssub.s32 16, 16
      %40 = vsyncadd [#allocation6], %s39
      %s42 = sshll.u32 [#allocation7], 4
      %s43 = int_to_ptr.vmem [resolvable:$true] %s42
      %45 = dma.hbm_to_vmem [thread:$0]  %s2, 16, %s43, [#allocation6]
    $region13: #{tpu_custom_call.1} parent=1 // pred_fallthru
      _
    // Predicated region
    $region14: #{tpu_custom_call.1} parent=1 // pred_check
      _
    $region15: #{tpu_custom_call.1} parent=1 // pred_check_branch
      %47 = sbr.rel (0) target = $region17
    $region16: #{tpu_custom_call.1} parent=1 // pred_region
      %s49 = ssub.s32 2048, 2048
      %50 = vsyncadd [#allocation9], %s49
      %s51 = sshll.u32 [#allocation8], 4
      %s52 = int_to_ptr.vmem [resolvable:$true] %s51
      %57 = dma.hbm_to_vmem [thread:$0]  %s3, 2048, %s52, [#allocation9], 128, 128, 8
    $region17: #{tpu_custom_call.1} parent=1 // pred_fallthru
      _
    // Predicated region
    $region18: #{tpu_custom_call.1} parent=1 // pred_check
      _
    $region19: #{tpu_custom_call.1} parent=1 // pred_check_branch
      %59 = sbr.rel (0) target = $region21
    $region20: #{tpu_custom_call.1} parent=1 // pred_region
      %s61 = ssub.s32 16, 16
      %62 = vsyncadd [#allocation9], %s61
      %s64 = sshll.u32 [#allocation10], 4
      %s65 = int_to_ptr.vmem [resolvable:$true] %s64
      %67 = dma.hbm_to_vmem [thread:$0]  %s4, 16, %s65, [#allocation9]
    $region21: #{tpu_custom_call.1} parent=1 // pred_fallthru
      _
    // Predicated region
    $region22: #{tpu_custom_call.1} parent=1 // pred_check
      _
    $region23: #{tpu_custom_call.1} parent=1 // pred_check_branch
      %69 = sbr.rel (0) target = $region25
    $region24: #{tpu_custom_call.1} parent=1 // pred_region
      %70 = dma.done [#allocation3], 128
    $region25: #{tpu_custom_call.1} parent=1 // pred_fallthru
      _
    // Predicated region
    $region26: #{tpu_custom_call.1} parent=1 // pred_check
      _
    $region27: #{tpu_custom_call.1} parent=1 // pred_check_branch
      %72 = sbr.rel (0) target = $region29
    $region28: #{tpu_custom_call.1} parent=1 // pred_region
      %73 = dma.done [#allocation6], 256
    $region29: #{tpu_custom_call.1} parent=1 // pred_fallthru
      _
    // Predicated region
    $region30: #{tpu_custom_call.1} parent=1 // pred_check
      _
    $region31: #{tpu_custom_call.1} parent=1 // pred_check_branch
      %75 = sbr.rel (0) target = $region33
    $region32: #{tpu_custom_call.1} parent=1 // pred_region
      %76 = dma.done [#allocation6], 16
    $region33: #{tpu_custom_call.1} parent=1 // pred_fallthru
      _
    // Predicated region
    $region34: #{tpu_custom_call.1} parent=1 // pred_check
      _
    $region35: #{tpu_custom_call.1} parent=1 // pred_check_branch
      %78 = sbr.rel (0) target = $region37
    $region36: #{tpu_custom_call.1} parent=1 // pred_region
      %79 = dma.done [#allocation9], 2048
    $region37: #{tpu_custom_call.1} parent=1 // pred_fallthru
      _
    // Predicated region
    $region38: #{tpu_custom_call.1} parent=1 // pred_check
      _
    $region39: #{tpu_custom_call.1} parent=1 // pred_check_branch
      %81 = sbr.rel (0) target = $region41
    $region40: #{tpu_custom_call.1} parent=1 // pred_region
      %82 = dma.done [#allocation9], 16
    $region41: #{tpu_custom_call.1} parent=1 // pred_fallthru
      _
    %v83 = vld [vmem:[#allocation2] sm:$0xff]
    %v84 = vld [vmem:[#allocation5] sm:$0xff]
    %v85 = vld [vmem:[#allocation5 + $0x8] sm:$0xff]
    %v86 = vld [vmem:[#allocation7] sm:$0x1]
    %v88 = vlaneseq
    %v89 = vshrl.u32 %v88, 7
    %v90 = vsub.s32 0, %v89
    %v91 = vrot.slane %v86, %v90
    %vm93 = vcmask 130048
    %v95 = vsel %vm93, %v83, 0
    %97 = vmatprep.subr.mxu0 0.0
    %98 = vmatpush1.msra.mxu0 %v84
    %99 = vmatprep.subr.mxu0 0.0
    %100 = vmatpush1.msra.mxu0 %v85
    %101 = vmatprep.subr.mxu0 0.0
    %102 = vmatpush1.msra.mxu0 0.0
    %103 = vmatprep.subr.mxu0 0.0
    %104 = vmatpush1.msra.mxu0 0.0
    %105 = vmatprep.subr.mxu0 0.0
    %106 = vmatpush1.msra.mxu0 0.0
    %107 = vmatprep.subr.mxu0 0.0
    %108 = vmatpush1.msra.mxu0 0.0
    %109 = vmatprep.subr.mxu0 0.0
    %110 = vmatpush1.msra.mxu0 0.0
    %111 = vmatprep.subr.mxu0 0.0
    %112 = vmatpush1.msra.mxu0 0.0
    %113 = vmatprep.subr.mxu0 0.0
    %114 = vmatpush1.msra.mxu0 0.0
    %115 = vmatprep.subr.mxu0 0.0
    %116 = vmatpush1.msra.mxu0 0.0
    %117 = vmatprep.subr.mxu0 0.0
    %118 = vmatpush1.msra.mxu0 0.0
    %119 = vmatprep.subr.mxu0 0.0
    %120 = vmatpush1.msra.mxu0 0.0
    %121 = vmatprep.subr.mxu0 0.0
    %122 = vmatpush1.msra.mxu0 0.0
    %123 = vmatprep.subr.mxu0 0.0
    %124 = vmatpush1.msra.mxu0 0.0
    %125 = vmatprep.subr.mxu0 0.0
    %126 = vmatpush1.msra.mxu0 0.0
    %127 = vmatprep.subr.mxu0 0.0
    %128 = vmatpush1.msra.mxu0 0.0
    %129 = vmatprep.subr.mxu0 0.0
    %130 = vmatpush1.msra.mxu0 0.0
    %131 = vmatprep.subr.mxu0 0.0
    %132 = vmatpush1.msra.mxu0 0.0
    %133 = vmatprep.subr.mxu0 0.0
    %134 = vmatpush1.msra.mxu0 0.0
    %135 = vmatprep.subr.mxu0 0.0
    %136 = vmatpush1.msra.mxu0 0.0
    %137 = vmatprep.subr.mxu0 0.0
    %138 = vmatpush1.msra.mxu0 0.0
    %139 = vmatprep.subr.mxu0 0.0
    %140 = vmatpush1.msra.mxu0 0.0
    %141 = vmatprep.subr.mxu0 0.0
    %142 = vmatpush1.msra.mxu0 0.0
    %143 = vmatprep.subr.mxu0 0.0
    %144 = vmatpush1.msra.mxu0 0.0
    %145 = vmatprep.subr.mxu0 0.0
    %146 = vmatpush1.msra.mxu0 0.0
    %147 = vmatprep.subr.mxu0 0.0
    %148 = vmatpush1.msra.mxu0 0.0
    %149 = vmatprep.subr.mxu0 0.0
    %150 = vmatpush1.msra.mxu0 0.0
    %151 = vmatprep.subr.mxu0 0.0
    %152 = vmatpush1.msra.mxu0 0.0
    %153 = vmatprep.subr.mxu0 0.0
    %154 = vmatpush1.msra.mxu0 0.0
    %155 = vmatprep.subr.mxu0 0.0
    %156 = vmatpush1.msra.mxu0 0.0
    %157 = vmatprep.subr.mxu0 0.0
    %158 = vmatpush1.msra.mxu0 0.0
    %159 = vmatprep.subr.mxu0 0.0
    %160 = vmatpush1.msra.mxu0 0.0
    %161 = vmatprep.mubr.f32.mxu0 0.0
    %162 = vmatmul.mubr.f32.gmra.mrb[0].mxu0 %v95
    %v163 = vpop.f32.mrb[0].mxu0
    %v164 = vadd.f32 %v91, %v163
    %v165 = vpop.f32.mrb[0].mxu0
    %166 = vdwg.mxu0
    %v167 = vmax.f32 %v164, 0.0
    %v168 = vld [vmem:[#allocation8] sm:$0xff]
    %v169 = vld [vmem:[#allocation8 + $0x8] sm:$0xff]
    %v170 = vld [vmem:[#allocation8 + $0x10] sm:$0xff]
    %v171 = vld [vmem:[#allocation8 + $0x18] sm:$0xff]
    %v172 = vld [vmem:[#allocation8 + $0x20] sm:$0xff]
    %v173 = vld [vmem:[#allocation8 + $0x28] sm:$0xff]
    %v174 = vld [vmem:[#allocation8 + $0x30] sm:$0xff]
    %v175 = vld [vmem:[#allocation8 + $0x38] sm:$0xff]
    %v176 = vld [vmem:[#allocation8 + $0x40] sm:$0xff]
    %v177 = vld [vmem:[#allocation8 + $0x48] sm:$0xff]
    %v178 = vld [vmem:[#allocation8 + $0x50] sm:$0xff]
    %v179 = vld [vmem:[#allocation8 + $0x58] sm:$0xff]
    %v180 = vld [vmem:[#allocation8 + $0x60] sm:$0xff]
    %v181 = vld [vmem:[#allocation8 + $0x68] sm:$0xff]
    %v182 = vld [vmem:[#allocation8 + $0x70] sm:$0xff]
    %v183 = vld [vmem:[#allocation8 + $0x78] sm:$0xff]
    %v184 = vld [vmem:[#allocation10] sm:$0x1]
    %v186 = vlaneseq
    %v187 = vshrl.u32 %v186, 7
    %v188 = vsub.s32 0, %v187
    %v189 = vrot.slane %v184, %v188
    %191 = vmatprep.subr.mxu0 0.0
    %192 = vmatpush1.msra.mxu0 %v168
    %193 = vmatprep.subr.mxu0 0.0
    %194 = vmatpush1.msra.mxu0 %v169
    %195 = vmatprep.subr.mxu0 0.0
    %196 = vmatpush1.msra.mxu0 %v170
    %197 = vmatprep.subr.mxu0 0.0
    %198 = vmatpush1.msra.mxu0 %v171
    %199 = vmatprep.subr.mxu0 0.0
    %200 = vmatpush1.msra.mxu0 %v172
    %201 = vmatprep.subr.mxu0 0.0
    %202 = vmatpush1.msra.mxu0 %v173
    %203 = vmatprep.subr.mxu0 0.0
    %204 = vmatpush1.msra.mxu0 %v174
    %205 = vmatprep.subr.mxu0 0.0
    %206 = vmatpush1.msra.mxu0 %v175
    %207 = vmatprep.subr.mxu0 0.0
    %208 = vmatpush1.msra.mxu0 %v176
    %209 = vmatprep.subr.mxu0 0.0
    %210 = vmatpush1.msra.mxu0 %v177
    %211 = vmatprep.subr.mxu0 0.0
    %212 = vmatpush1.msra.mxu0 %v178
    %213 = vmatprep.subr.mxu0 0.0
    %214 = vmatpush1.msra.mxu0 %v179
    %215 = vmatprep.subr.mxu0 0.0
    %216 = vmatpush1.msra.mxu0 %v180
    %217 = vmatprep.subr.mxu0 0.0
    %218 = vmatpush1.msra.mxu0 %v181
    %219 = vmatprep.subr.mxu0 0.0
    %220 = vmatpush1.msra.mxu0 %v182
    %221 = vmatprep.subr.mxu0 0.0
    %222 = vmatpush1.msra.mxu0 %v183
    %223 = vmatprep.subr.mxu0 0.0
    %224 = vmatpush1.msra.mxu0 0.0
    %225 = vmatprep.subr.mxu0 0.0
    %226 = vmatpush1.msra.mxu0 0.0
    %227 = vmatprep.subr.mxu0 0.0
    %228 = vmatpush1.msra.mxu0 0.0
    %229 = vmatprep.subr.mxu0 0.0
    %230 = vmatpush1.msra.mxu0 0.0
    %231 = vmatprep.subr.mxu0 0.0
    %232 = vmatpush1.msra.mxu0 0.0
    %233 = vmatprep.subr.mxu0 0.0
    %234 = vmatpush1.msra.mxu0 0.0
    %235 = vmatprep.subr.mxu0 0.0
    %236 = vmatpush1.msra.mxu0 0.0
    %237 = vmatprep.subr.mxu0 0.0
    %238 = vmatpush1.msra.mxu0 0.0
    %239 = vmatprep.subr.mxu0 0.0
    %240 = vmatpush1.msra.mxu0 0.0
    %241 = vmatprep.subr.mxu0 0.0
    %242 = vmatpush1.msra.mxu0 0.0
    %243 = vmatprep.subr.mxu0 0.0
    %244 = vmatpush1.msra.mxu0 0.0
    %245 = vmatprep.subr.mxu0 0.0
    %246 = vmatpush1.msra.mxu0 0.0
    %247 = vmatprep.subr.mxu0 0.0
    %248 = vmatpush1.msra.mxu0 0.0
    %249 = vmatprep.subr.mxu0 0.0
    %250 = vmatpush1.msra.mxu0 0.0
    %251 = vmatprep.subr.mxu0 0.0
    %252 = vmatpush1.msra.mxu0 0.0
    %253 = vmatprep.subr.mxu0 0.0
    %254 = vmatpush1.msra.mxu0 0.0
    %255 = vmatprep.mubr.f32.mxu0 0.0
    %256 = vmatmul.mubr.f32.gmra.mrb[0].mxu0 %v167
    %v257 = vpop.f32.mrb[0].mxu0
    %v258 = vadd.f32 %v189, %v257
    %v259 = vpop.f32.mrb[0].mxu0
    %260 = vdwg.mxu0
    %v261 = vlaneseq
    %v262 = vand.u32 %v261, 127
    %vm263 = vcmp.lt.s32.totalorder %v262, 8
    %v264 = vsel %vm263, %v258, -inf
    %265 = vmax.xlane.f32.xlu0 %v264
    %v266 = vpop.xlane.xlu0 %265
    %v267 = vsub.f32 %v264, %v266
    %v268 = vmul.f32 %v267, 1.442695
    %v269 = vpow.pop %v268
    %270 = vadd.xlane.f32.xlu0 %v269
    %v271 = vpop.xlane.xlu0 %270
    %v272 = vrcp.pop %v271
    %v273 = vmul.f32 %v269, %v272
    %vm274 = vcmp.eq.s32.totalorder %v262, 8
    %v275 = vsel %vm274, %v258, %v273
    %276 = vst [vmem:[#allocation11] sm:$0xff] %v275
    // Predicated region
    $region42: #{tpu_custom_call.1} parent=1 // pred_check
      _
    $region43: #{tpu_custom_call.1} parent=1 // pred_check_branch
      %278 = sbr.rel (0) target = $region45
    $region44: #{tpu_custom_call.1} parent=1 // pred_region
      %s280 = ssub.s32 128, 128
      %281 = vsyncadd [#allocation4], %s280
      %s283 = sshll.u32 [#allocation11], 4
      %s284 = int_to_ptr.vmem [resolvable:$true] %s283
      %286 = dma.vmem_to_hbm [thread:$0]  %s284, 128, %s5, [#allocation4]
    $region45: #{tpu_custom_call.1} parent=1 // pred_fallthru
      _
    // Predicated region
    $region46: #{tpu_custom_call.1} parent=1 // pred_check
      _
    $region47: #{tpu_custom_call.1} parent=1 // pred_check_branch
      %288 = sbr.rel (0) target = $region49
    $region48: #{tpu_custom_call.1} parent=1 // pred_region
      %289 = dma.done [#allocation4], 128
    $region49: #{tpu_custom_call.1} parent=1 // pred_fallthru
      _
    %290 = vsyncpa [#allocation3], 1
    %291 = vsyncpa [#allocation6], 1
    %292 = vsyncpa [#allocation9], 1
    %293 = vsyncpa [#allocation4], 1

</llo_original>
